<compile_context>
chip_gen: v5e
topology: v5e:2x2
jax: 0.10.0
libtpu: 0.0.40
codegen_flags: <defaults>
</compile_context>

<pallas_src>
import math
import jax
import jax.numpy as jnp
from jax.experimental import pallas as pl
from jax.experimental.pallas import tpu as pltpu


# ---------------------------------------------------------------------------
# pe table (plain JAX glue — parameter setup, not the hot path)
# ---------------------------------------------------------------------------
def create_pe_array(encoding_dimension, base_period, initial_period, max_len):
    """Returns pe of shape (1, max_len, encoding_dimension), matching the PyTorch code."""
    position = jnp.arange(max_len, dtype=jnp.float32)[:, None]              # [L, 1]
    even_idx = jnp.arange(0, encoding_dimension, 2, dtype=jnp.float32)
    odd_idx = jnp.arange(1, encoding_dimension, 2, dtype=jnp.float32)
    period_even = initial_period * jnp.power(jnp.float32(base_period), even_idx / 2.0)
    period_odd = initial_period * jnp.power(jnp.float32(base_period), (odd_idx - 1.0) / 2.0)
    pe = jnp.zeros((1, max_len, encoding_dimension), dtype=jnp.float32)
    pe = pe.at[0, :, 0::2].set(jnp.sin(2.0 * jnp.pi * position / period_even[None, :]))
    pe = pe.at[0, :, 1::2].set(jnp.cos(2.0 * jnp.pi * position / period_odd[None, :]))
    return pe


# ---------------------------------------------------------------------------
# Kernels
# ---------------------------------------------------------------------------
def _appender_kernel(x_ref, pe_ref, wx_ref, o_ref):
    """pe block has the same (TM, D) shape as the x block."""
    acc = jnp.dot(x_ref[...], wx_ref[...], preferred_element_type=jnp.float32)
    o_ref[...] = (acc + pe_ref[...]).astype(o_ref.dtype)


def _make_resident_kernel(TM, S):
    """Full (S, D) pe_term stays VMEM-resident; slice the TM rows for this block."""
    blocks_per_seq = S // TM

    def kernel(x_ref, pe_ref, wx_ref, o_ref):
        sb = pl.program_id(0) % blocks_per_seq
        off = pl.multiple_of(sb * TM, 8)          # TM is a multiple of 8 on this path
        acc = jnp.dot(x_ref[...], wx_ref[...], preferred_element_type=jnp.float32)
        o_ref[...] = (acc + pe_ref[pl.ds(off, TM), :]).astype(o_ref.dtype)

    return kernel


# ---------------------------------------------------------------------------
# Tiling planner
# ---------------------------------------------------------------------------
_PER_BUFFER_BYTES = 1 << 20     # ~1 MiB per pipelined buffer: ~85% of HBM roofline,
                                # and the 6-buffer working set fits every generation.
_PE_RESIDENT_BYTES = 4 << 20    # pin full pe_term in VMEM up to this size


def _plan_tiling(B, S, D, itemsize):
    """Choose (TM, mode); mode in {"const", "resident", "modular", "streamed"}."""
    M = B * S
    row_bytes = D * max(itemsize, 4)             # out / pe rows are >= 4 bytes
    rows_budget = max(8, _PER_BUFFER_BYTES // row_bytes)

    if M <= rows_budget:
        return M, "const"                        # whole problem is one tile

    if S <= rows_budget:
        # A tile is k whole sequences; keep k*S a multiple of 8 (needed when TM < M).
        m8 = 8 // math.gcd(S, 8)
        k = max(1, rows_budget // S)
        k = max(m8, (k // m8) * m8)
        if k >= B:
            return M, "const"
        return k * S, "const"

    # Large S: tile within a sequence; need TM | S and TM % 8 == 0.
    tm_cap = max(8, (rows_budget // 8) * 8)
    for t in range(tm_cap, 7, -8):
        if S % t == 0:
            if S * D * 4 <= _PE_RESIDENT_BYTES:
                return t, "resident"             # pe_term pinned in VMEM, sliced in-kernel
            return t, "modular"                  # pe_term re-fetched per sequence (rare)
    # Pathological S (no multiple-of-8 divisor): stream a per-row pe (extra traffic).
    return tm_cap, "streamed"


# ---------------------------------------------------------------------------
# Parameter glue (x-invariant — compute once / cache / keep under jit)
# ---------------------------------------------------------------------------
def prepare_appender_params(pe, weight, bias, seq_len, x_dtype=jnp.float32):
    """
    pe:     [1, max_len, A]
    weight: [D, D + A]   (PyTorch nn.Linear layout: [out_features, in_features])
    bias:   [D]
    Returns (wx [D, D] in x_dtype, pe_term [seq_len, D] in f32).
    """
    D = weight.shape[0]
    wx = weight[:, :D].T.astype(x_dtype)                               # [D, D]
    wp = weight[:, D:].T.astype(jnp.float32)                           # [A, D]
    pe_s = pe[0, :seq_len, :].astype(jnp.float32)                      # [S, A]
    pe_term = pe_s @ wp + bias.astype(jnp.float32)                     # [S, D]
    return wx, pe_term


# ---------------------------------------------------------------------------
# Hot path: out = x @ Wx + pe_term  (flattened-M tiling)
# ---------------------------------------------------------------------------
def positional_appender_from_params(x, wx, pe_term):
    B, S, D = x.shape
    assert wx.shape == (D, D)
    assert pe_term.shape == (S, D)

    M = B * S
    TM, mode = _plan_tiling(B, S, D, x.dtype.itemsize)

    x_flat = x.reshape(M, D)
    grid_m = pl.cdiv(M, TM)
    M_pad = grid_m * TM
    if M_pad != M:
        x_flat = jnp.pad(x_flat, ((0, M_pad - M), (0, 0)))

    x_spec = pl.BlockSpec((TM, D), lambda m: (m, 0))
    out_spec = pl.BlockSpec((TM, D), lambda m: (m, 0))
    wx_spec = pl.BlockSpec((D, D), lambda m: (0, 0))       # constant -> DMA'd once

    if mode == "const":
        # tile spans whole sequences: pre-tile pe_term to one (TM, D) block,
        # constant index map -> VMEM-resident, DMA'd once for the whole grid.
        pe_arr = jnp.tile(pe_term, (TM // S, 1))
        pe_spec = pl.BlockSpec((TM, D), lambda m: (0, 0))
        kernel = _appender_kernel
        pe_rows = TM
    elif mode == "resident":
        pe_arr = pe_term                                    # [S, D], pinned in VMEM
        pe_spec = pl.BlockSpec((S, D), lambda m: (0, 0))
        kernel = _make_resident_kernel(TM, S)
        pe_rows = S
    elif mode == "modular":
        bps = S // TM
        pe_arr = pe_term
        pe_spec = pl.BlockSpec((TM, D), lambda m: (m % bps, 0))
        kernel = _appender_kernel
        pe_rows = TM
    else:  # "streamed" — pathological S; full per-row pe stream, same tiling as x
        reps = -(-M_pad // S)
        pe_arr = jnp.tile(pe_term, (reps, 1))[:M_pad]
        pe_spec = pl.BlockSpec((TM, D), lambda m: (m, 0))
        kernel = _appender_kernel
        pe_rows = TM

    # --- explicit VMEM accounting (double-buffered working set + headroom) ---
    itemsize = x.dtype.itemsize
    working_set = (
        2 * TM * D * itemsize          # x (double-buffered)
        + 2 * TM * D * itemsize        # out (double-buffered)
        + 2 * pe_rows * D * 4          # pe (conservatively counted twice)
        + 2 * D * D * itemsize         # wx
    )
    vmem_limit = max(2 * working_set, 24 << 20)
    try:
        cap = pltpu.get_tpu_info().vmem_capacity_bytes - (8 << 20)
    except Exception:
        cap = 48 << 20                 # v7x-safe fallback (64 MiB physical / core)
    vmem_limit = int(min(vmem_limit, cap))

    out_flat = pl.pallas_call(
        kernel,
        out_shape=jax.ShapeDtypeStruct((M_pad, D), x.dtype),
        grid_spec=pltpu.PrefetchScalarGridSpec(
            num_scalar_prefetch=0,
            grid=(grid_m,),
            in_specs=[x_spec, pe_spec, wx_spec],
            out_specs=out_spec,
        ),
        compiler_params=pltpu.CompilerParams(
            dimension_semantics=("parallel",),
            vmem_limit_bytes=vmem_limit,
        ),
    )(x_flat, pe_arr, wx)

    return out_flat[:M].reshape(B, S, D)


def positional_appender(x, pe, weight, bias):
    """
    Convenience wrapper. For serving, call prepare_appender_params once and
    reuse (wx, pe_term); under jit the glue is compiled once per shape anyway.
    """
    B, S, D = x.shape
    A = pe.shape[-1]
    assert weight.shape == (D, D + A)
    assert S <= pe.shape[1], "sequence length exceeds max_len of positional encoding"
    wx, pe_term = prepare_appender_params(pe, weight, bias, S, x_dtype=x.dtype)
    return positional_appender_from_params(x, wx, pe_term)


# ---------------------------------------------------------------------------
# Reference (pure JAX) for correctness check
# ---------------------------------------------------------------------------
def positional_appender_ref(x, pe, weight, bias):
    B, S, D = x.shape
    A = pe.shape[-1]
    thing = jnp.broadcast_to(pe[:, :S, :], (B, S, A))
    appended = jnp.concatenate([x, thing], axis=-1)
    return appended @ weight.T + bias


if __name__ == "__main__":
    # Small shapes consistent with the module: batch=2, seq=8, d_model=32.
    B, S, D = 2, 8, 32
    additional_dim = D                      # default: additional_dim = d_model
    max_len = 64
    base_period = math.pow(10000.0, 2.0 / additional_dim)
    initial_period = 2.0 * math.pi

    key = jax.random.PRNGKey(0)
    kx, kw, kb = jax.random.split(key, 3)

    x = jax.random.normal(kx, (B, S, D), dtype=jnp.float32)

    # Deterministic parameter init (shapes from nn.Linear(d_model + additional_dim, d_model)).
    fan_in = D + additional_dim
    bound = 1.0 / math.sqrt(fan_in)
    weight = jax.random.uniform(kw, (D, fan_in), minval=-bound, maxval=bound,
                                dtype=jnp.float32)
    bias = jax.random.uniform(kb, (D,), minval=-bound, maxval=bound, dtype=jnp.float32)

    pe = create_pe_array(additional_dim, base_period, initial_period, max_len)

    fwd = jax.jit(positional_appender)      # parameter glue compiled once per shape
    out = fwd(x, pe, weight, bias)
    out = jax.block_until_ready(out)

    ref = positional_appender_ref(x, pe, weight, bias)
    assert out.shape == (B, S, D)
    assert jnp.allclose(out, ref, atol=1e-5, rtol=1e-5), "mismatch vs reference"

    print("KERNEL_OK")
</pallas_src>

<mosaic_0001>
module attributes {stable_mosaic.version = 11 : i64} {
  func.func @_appender_kernel(%arg0: i32, %arg1: memref<16x32xf32, #tpu.memory_space<vmem>>, %arg2: memref<16x32xf32, #tpu.memory_space<vmem>>, %arg3: memref<32x32xf32, #tpu.memory_space<vmem>>, %arg4: memref<16x32xf32, #tpu.memory_space<vmem>>) attributes {dimension_semantics = [#tpu.dimension_semantics<parallel>], iteration_bounds = array<i64: 1>, scalar_prefetch = 0 : i64, scratch_operands = 0 : i64, tpu.core_type = #tpu.core_type<tc>, window_params = [{transform_indices = @transform_0, window_bounds = array<i64: 16, 32>}, {pipeline_mode = #tpu.pipeline_mode<synchronous>, transform_indices = @transform_1, window_bounds = array<i64: 16, 32>}, {pipeline_mode = #tpu.pipeline_mode<synchronous>, transform_indices = @transform_2, window_bounds = array<i64: 32, 32>}, {transform_indices = @transform_3, window_bounds = array<i64: 16, 32>}]} {
    %c0 = arith.constant 0 : index
    %c0_0 = arith.constant 0 : index
    %0 = vector.load %arg1[%c0, %c0_0] : memref<16x32xf32, #tpu.memory_space<vmem>>, vector<16x32xf32>
    %c0_1 = arith.constant 0 : index
    %c0_2 = arith.constant 0 : index
    %1 = vector.load %arg3[%c0_1, %c0_2] : memref<32x32xf32, #tpu.memory_space<vmem>>, vector<32x32xf32>
    %cst = arith.constant dense<0.000000e+00> : vector<16x32xf32>
    %2 = tpu.matmul %0, %1, %cst {dimension_numbers = #tpu.dot_dimension_numbers<[1], [0], [0], [1], [0, 0, 1, 1], [], []>} : vector<16x32xf32>, vector<32x32xf32>, vector<16x32xf32> -> vector<16x32xf32>
    %c0_3 = arith.constant 0 : index
    %c0_4 = arith.constant 0 : index
    %3 = vector.load %arg2[%c0_3, %c0_4] : memref<16x32xf32, #tpu.memory_space<vmem>>, vector<16x32xf32>
    %4 = arith.addf %2, %3 : vector<16x32xf32>
    %c0_5 = arith.constant 0 : index
    %c0_6 = arith.constant 0 : index
    %5 = vector.load %arg4[%c0_5, %c0_6] : memref<16x32xf32, #tpu.memory_space<vmem>>, vector<16x32xf32>
    tpu.vector_store %arg4[%c0_5, %c0_6], %4 {strides = array<i32>} : memref<16x32xf32, #tpu.memory_space<vmem>>, vector<16x32xf32>,
    return
  }
  func.func @transform_0(%arg0: i32) -> (i32, i32) {
    %c0_i32 = arith.constant 0 : i32
    %c0_i32_0 = arith.constant 0 : i32
    return %arg0, %c0_i32 : i32, i32
  }
  func.func @transform_1(%arg0: i32) -> (i32, i32) {
    %c0_i32 = arith.constant 0 : i32
    %c0_i32_0 = arith.constant 0 : i32
    %c0_i32_1 = arith.constant 0 : i32
    return %c0_i32, %c0_i32_0 : i32, i32
  }
  func.func @transform_2(%arg0: i32) -> (i32, i32) {
    %c0_i32 = arith.constant 0 : i32
    %c0_i32_0 = arith.constant 0 : i32
    %c0_i32_1 = arith.constant 0 : i32
    return %c0_i32, %c0_i32_0 : i32, i32
  }
  func.func @transform_3(%arg0: i32) -> (i32, i32) {
    %c0_i32 = arith.constant 0 : i32
    %c0_i32_0 = arith.constant 0 : i32
    return %arg0, %c0_i32 : i32, i32
  }
}

</mosaic_0001>

<llo_original>
// kernel: positional_appender.1
$region0: #{positional_appender.1}
  #allocation0 [shape = 'u32[]', space=smem, size = 0x4, offset = 0x4, fixed_abs, tag = 'smem constant byte address 0x4 - core index']
  #allocation1 [shape = 'u32[72,128]{1,0:T(1,128)}', space=vmem, size = 0x9000, scoped, tag = 'internal scratch']
  %s0 = inlined_call_operand.vmem [shape: f32[16,32], index: 0, kind: input, shape index: {}]
  %s1 = inlined_call_operand.vmem [shape: f32[16,32], index: 1, kind: input, shape index: {}]
  %s2 = inlined_call_operand.vmem [shape: f32[32,32], index: 2, kind: input, shape index: {}]
  %s3 = inlined_call_operand.hbm [shape: f32[16,32], index: 3, kind: output, shape index: {}]
  %s4 = sld [smem:[#allocation0]]
  $region22: #{positional_appender.1} parent=0
    _
  %s6 = ssub.s32 1, %s4
  %s7 = scalar_select 0, %s6, %s4
  $region1: #{positional_appender.1} parent=0
    #allocation2 [shape = 'u8[8192]{0}', space=vmem, size = 0x2000, scoped, tag = 'output window, operand 0, single buffered']
    #allocation3 [shape = 's32[1]{0}', space=sflag, size = 0x4, scoped, tag = 'scoped memory for positional_appender.1']
    %8 = vsyncpa [#allocation3], 0
    // Predicated region
    $region2: #{positional_appender.1} parent=1 // pred_check
      _
    $region3: #{positional_appender.1} parent=1 // pred_check_branch
      %10 = sbr.rel (0) target = $region5
    $region4: #{positional_appender.1} parent=1 // pred_region
      _
    $region5: #{positional_appender.1} parent=1 // pred_fallthru
      _
    // Predicated region
    $region6: #{positional_appender.1} parent=1 // pred_check
      _
    $region7: #{positional_appender.1} parent=1 // pred_check_branch
      %12 = sbr.rel (0) target = $region9
    $region8: #{positional_appender.1} parent=1 // pred_region
      _
    $region9: #{positional_appender.1} parent=1 // pred_fallthru
      _
    // Predicated region
    $region10: #{positional_appender.1} parent=1 // pred_check
      _
    $region11: #{positional_appender.1} parent=1 // pred_check_branch
      %14 = sbr.rel (0) target = $region13
    $region12: #{positional_appender.1} parent=1 // pred_region
      _
    $region13: #{positional_appender.1} parent=1 // pred_fallthru
      _
    %v15 = vld [vmem:[%s0] sm:$0xff]
    %v16 = vld [vmem:[%s0 + $0x8] sm:$0xff]
    %v17 = vld [vmem:[%s2] sm:$0xff]
    %v18 = vld [vmem:[%s2 + $0x8] sm:$0xff]
    %v19 = vld [vmem:[%s2 + $0x10] sm:$0xff]
    %v20 = vld [vmem:[%s2 + $0x18] sm:$0xff]
    %v21 = vld [vmem:[%s1] sm:$0xff]
    %v22 = vld [vmem:[%s1 + $0x8] sm:$0xff]
    %vm23 = vcmask 261120
    %v25 = vsel %vm23, %v15, 0
    %v28 = vsel %vm23, %v16, 0
    %30 = vmatpush.msra.mxu0 0.0
    %31 = vmatpush.msra.mxu0 0.0
    %32 = vmatpush.msra.mxu0 0.0
    %33 = vmatpush.msra.mxu0 0.0
    %34 = vmatpush.msra.mxu0 0.0
    %35 = vmatpush.msra.mxu0 0.0
    %36 = vmatpush.msra.mxu0 0.0
    %37 = vmatpush.msra.mxu0 0.0
    %38 = vmatpush.msra.mxu0 0.0
    %39 = vmatpush.msra.mxu0 0.0
    %40 = vmatpush.msra.mxu0 0.0
    %41 = vmatpush.msra.mxu0 0.0
    %42 = vmatpush.msra.mxu0 %v20
    %43 = vmatpush.msra.mxu0 %v19
    %44 = vmatpush.msra.mxu0 %v18
    %45 = vmatpush.msra.mxu0 %v17
    %46 = vmatmul.f32.gmra.mxu0 %v25
    %v47 = vpop.f32.mrf.mxu0
    %v48 = vadd.f32 %v21, %v47
    %49 = vmatmul.f32.gmra.mxu0 %v28
    %v50 = vpop.f32.mrf.mxu0
    %v51 = vadd.f32 %v22, %v50
    %52 = vdwg.mxu0
    %53 = vst.msk [vmem:[#allocation2] sm:$0xff] %vm23, %v48
    %54 = vst.msk [vmem:[#allocation2 + $0x8] sm:$0xff] %vm23, %v51
    // Predicated region
    $region14: #{positional_appender.1} parent=1 // pred_check
      _
    $region15: #{positional_appender.1} parent=1 // pred_check_branch
      %56 = sbr.rel (0) target = $region17
    $region16: #{positional_appender.1} parent=1 // pred_region
      %58 = vsyncadd [#allocation3], 0
      %s59 = sshll.u32 [#allocation2], 4
      %s60 = int_to_ptr.vmem [resolvable:$true] %s59
      %s61 = sshll.u32 %s3, 4
      %s62 = int_to_ptr.hbm [resolvable:$true] %s61
      %67 = dma.vmem_to_hbm [thread:$0]  %s60, 256, %s62, [#allocation3], 128, 128, 8
    $region17: #{positional_appender.1} parent=1 // pred_fallthru
      _
    // Predicated region
    $region18: #{positional_appender.1} parent=1 // pred_check
      _
    $region19: #{positional_appender.1} parent=1 // pred_check_branch
      %69 = sbr.rel (0) target = $region21
    $region20: #{positional_appender.1} parent=1 // pred_region
      %71 = dma.done [#allocation3], 256
    $region21: #{positional_appender.1} parent=1 // pred_fallthru
      _
    %72 = vsyncpa [#allocation3], 1

</llo_original>
